<compile_context>
chip_gen: v7x
topology: tpu7x:2x2x1
jax: 0.10.0
libtpu: 0.0.40
codegen_flags: <defaults>
</compile_context>

<pallas_src>
import functools

import numpy as np

import jax
import jax.numpy as jnp
from jax.experimental import pallas as pl
from jax.experimental.pallas import tpu as pltpu


def mtclf_block_kernel(x_ref, wenc_ref, benc_ref, wcat_ref, bcat_ref,
                       hmask_ref, y_ref, w_ref, loss_ref, *, NH, C):
    """One grid step == one block of T tasks (flattened to T*B rows)."""
    TB = x_ref.shape[1]
    TC = wcat_ref.shape[2]

    # ---- encoder: one fused (T*B, G) @ (G, Hp) MXU dot (bf16 in, f32 acc) --
    h = jax.nn.sigmoid(
        jnp.dot(x_ref[0], wenc_ref[...], preferred_element_type=jnp.float32)
        + benc_ref[...])                                       # (TB, Hp) f32

    # ---- all T tasks x 3 heads in ONE (T*B, Hp) @ (Hp, T*C) matmul ---------
    logits = jax.nn.sigmoid(
        jnp.dot(h.astype(jnp.bfloat16), wcat_ref[0],
                preferred_element_type=jnp.float32)
        + bcat_ref[0])                                         # (TB, TC) f32

    # ---- block-diagonal mask: each row only sees its own task's C lanes ----
    lane_id = jax.lax.broadcasted_iota(jnp.int32, (TB, TC), 1)
    y_all = y_ref[0]                                           # (TB, NH+1) i32
    base = y_all[:, NH:NH + 1]                                 # row's lane base
    diag = (lane_id >= base) & (lane_id < base + C)            # (TB, TC)

    # ---- logits in (0,1) (sigmoid) -> single shared exp, no max-subtract ---
    e = jnp.where(diag, jnp.exp(logits), 0.0)                  # (TB, TC)

    # per-head logsumexp via per-lane 0/1 head/class-validity masks
    hm = hmask_ref[0]                                          # (NH, 1, TC)
    lse = jnp.zeros((TB, 1), jnp.float32)
    for j in range(NH):                                        # static, NH == 3
        lse = lse + jnp.log(jnp.sum(e * hm[j], axis=-1, keepdims=True))

    # merged one-hot target: labels sit in disjoint lane ranges -> one lane-sum
    hit = lane_id == y_all[:, 0:1]
    for j in range(1, NH):
        hit = hit | (lane_id == y_all[:, j:j + 1])
    tgt = jnp.sum(jnp.where(hit, logits, 0.0), axis=-1, keepdims=True)

    # per-row weight already folds 1/B and zero-weight for padded tasks
    total = jnp.sum(w_ref[0] * (lse - tgt))

    # lane-dense partial-loss block; wrapper sums element [0, 0] over blocks
    loss_ref[...] = jnp.full(loss_ref.shape, total, jnp.float32)


@functools.partial(jax.jit, static_argnames=("tasks_per_block",))
def mtclf_forward(Xb, Wenc, benc, Wcat, bcat, hmask, yaux, roww,
                  tasks_per_block):
    NB, TB, G = Xb.shape
    Gw, Hp = Wenc.shape
    TC = Wcat.shape[2]
    NH = hmask.shape[1]
    T = tasks_per_block
    C = TC // T

    kernel = functools.partial(mtclf_block_kernel, NH=NH, C=C)

    # VMEM budget derived from the actual block tiles (not a hardcoded 32 MiB)
    def nbytes(shape, dt):
        return int(np.prod(shape)) * np.dtype(dt).itemsize
    lane = lambda n: -(-n // 128) * 128            # lane padding of last dim
    blk = (nbytes((TB, lane(G)), Xb.dtype)
           + nbytes((Hp, lane(TC)), Wcat.dtype)
           + nbytes((1, lane(TC)), jnp.float32)
           + nbytes((NH, 1, lane(TC)), jnp.float32)
           + nbytes((TB, lane(NH + 1)), jnp.int32)
           + nbytes((TB, 128), jnp.float32)
           + nbytes((8, 128), jnp.float32))
    resident = nbytes((Gw, Hp), Wenc.dtype) + nbytes((1, Hp), jnp.float32)
    scratch = 8 * TB * lane(TC) * 4 + 2 * TB * Hp * 4   # live f32 intermediates
    vmem_bytes = int(min(max(2 * blk + 2 * resident + scratch + (4 << 20),
                             16 << 20), 48 << 20))

    losses = pl.pallas_call(
        kernel,
        out_shape=jax.ShapeDtypeStruct((NB, 8, 128), jnp.float32),
        grid=(NB,),
        in_specs=[
            pl.BlockSpec((1, TB, G), lambda b: (b, 0, 0)),        # X block, bf16
            pl.BlockSpec((Gw, Hp), lambda b: (0, 0)),             # Wenc, bf16
            pl.BlockSpec((1, Hp), lambda b: (0, 0)),              # benc, f32
            pl.BlockSpec((1, Hp, TC), lambda b: (b, 0, 0)),       # Wcat blk bf16
            pl.BlockSpec((1, 1, TC), lambda b: (b, 0, 0)),        # bcat block
            pl.BlockSpec((1, NH, 1, TC), lambda b: (b, 0, 0, 0)),  # lane masks
            pl.BlockSpec((1, TB, NH + 1), lambda b: (b, 0, 0)),   # labels+base
            pl.BlockSpec((1, TB, 1), lambda b: (b, 0, 0)),        # row weights
        ],
        out_specs=pl.BlockSpec((1, 8, 128), lambda b: (b, 0, 0)),
        compiler_params=pltpu.CompilerParams(
            dimension_semantics=("parallel",),      # blocks are independent
            vmem_limit_bytes=vmem_bytes),
    )(Xb, Wenc, benc, Wcat, bcat, hmask, yaux, roww)
    return jnp.sum(losses[:, 0, 0])


def choose_tasks_per_block(K, B, target_rows=128):
    """T*B ~ target_rows fills the MXU M dim (128 on v5e; 256 on v6e/v7x),
    while keeping >= 2 grid blocks when K > 1 (v7x two-TensorCore sharding)."""
    cap = max(1, target_rows // max(B, 1))
    return max(1, min(cap, (K + 1) // 2 if K > 1 else 1))


def pack_mtclf_inputs(X, Wenc, benc, Wheads, bheads, y, num_cl, npad,
                      tasks_per_block):
    """Pack inputs for the blocked kernel: lane-dense per-block head weights,
    per-lane head/validity masks, shifted labels + row lane-base, row weights."""
    X = np.asarray(X, np.float32)
    Wenc = np.asarray(Wenc, np.float32)
    benc = np.asarray(benc, np.float32)
    Wheads = np.asarray(Wheads, np.float32)
    bheads = np.asarray(bheads, np.float32)
    y = np.asarray(y, np.int64)

    K, B, G = X.shape
    NH, H = Wheads.shape[1], Wheads.shape[2]
    C = NH * npad
    T = tasks_per_block
    NB = -(-K // T)
    K_pad = NB * T
    TB, TC = T * B, T * C
    Hp = -(-H // 128) * 128                 # 200 -> 256: full 128-lane tiles

    # encoder params padded to Hp (padded h columns hit zero Wcat rows below)
    Wenc_p = np.zeros((G, Hp), np.float32); Wenc_p[:, :H] = Wenc
    benc_p = np.zeros((1, Hp), np.float32); benc_p[:, :H] = benc

    # inputs: one (T*B, G) slab per grid block
    Xp = np.zeros((K_pad, B, G), np.float32); Xp[:K] = X
    Xb = Xp.reshape(NB, TB, G)

    # head weights/biases of a block packed lane-dense along one T*C axis:
    #   column t*C + j*npad + c  <->  task t (within block), head j, class c
    Wcat = np.zeros((K_pad, Hp, C), np.float32)
    bcat = np.zeros((K_pad, C), np.float32)
    for k in range(K):
        for j in range(NH):
            Wcat[k, :H, j * npad:(j + 1) * npad] = Wheads[k, j]
            bcat[k, j * npad:(j + 1) * npad] = bheads[k, j]
    Wcat_blk = (Wcat.reshape(NB, T, Hp, C).transpose(0, 2, 1, 3)
                .reshape(NB, Hp, TC))
    bcat_blk = bcat.reshape(NB, 1, TC)

    # per-lane 0/1 masks (head id + class validity); block-diag part in-kernel
    hmask = np.zeros((NB, NH, 1, TC), np.float32)
    # labels shifted to the block lane axis, plus each row's task lane-base
    y_pad = np.zeros((K_pad, B, NH), np.int64); y_pad[:K] = y
    yaux = np.zeros((NB, TB, NH + 1), np.int32)
    # per-row loss weight: 1/B for real tasks, 0 for padding tasks
    roww = np.zeros((NB, TB, 1), np.float32)
    for k in range(K_pad):
        nb, t = divmod(k, T)
        rows = slice(t * B, (t + 1) * B)
        for j in range(NH):
            n = int(num_cl[k][j]) if k < K else npad
            base = t * C + j * npad
            hmask[nb, j, 0, base:base + n] = 1.0
            yaux[nb, rows, j] = base + y_pad[k, :, j]
        yaux[nb, rows, NH] = t * C
        if k < K:
            roww[nb, rows, 0] = 1.0 / B

    return (jnp.asarray(Xb, jnp.bfloat16),
            jnp.asarray(Wenc_p, jnp.bfloat16),
            jnp.asarray(benc_p, jnp.float32),
            jnp.asarray(Wcat_blk, jnp.bfloat16),
            jnp.asarray(bcat_blk, jnp.float32),
            jnp.asarray(hmask, jnp.float32),
            jnp.asarray(yaux, jnp.int32),
            jnp.asarray(roww, jnp.float32))


def ref_forward(X, Wenc, benc, Wheads, bheads, y, num_cl):
    """Pure-JAX reference reproducing the PyTorch forward exactly (f32)."""
    K, B, _ = X.shape
    total = jnp.float32(0.0)
    for k in range(K):
        h = jax.nn.sigmoid(X[k] @ Wenc + benc[0])
        for j in range(3):
            n = num_cl[k][j]
            logits = jax.nn.sigmoid(h @ Wheads[k, j, :, :n] + bheads[k, j, :n])
            lse = jax.scipy.special.logsumexp(logits, axis=-1)
            tgt = logits[jnp.arange(B), y[k][:, j]]
            total = total + jnp.mean(lse - tgt)
    return total


if __name__ == "__main__":
    key = jax.random.PRNGKey(0)

    # small synthetic configuration consistent with mtclf.__init__/forward
    K = 6                       # number of tasks (len(num_cl))
    B = 8                       # batch per task
    G = 16                      # num_g (input features)
    H = 200                     # encoder output (nn.Linear(num_g, 200))
    NH = 3                      # heads per task (mt, mt2, mt3)
    num_cl = [[4, 5, 6], [3, 4, 5], [6, 3, 4], [5, 5, 3], [4, 6, 5], [3, 3, 6]]
    Npad = 8                    # pad every head to a common class width

    ks = jax.random.split(key, 8)

    # inputs: list X -> stacked (K, B, G); labels y[k] -> (K, B, 3) ints
    X = jax.random.normal(ks[0], (K, B, G), dtype=jnp.float32)
    y = jnp.stack([
        jnp.stack([jax.random.randint(jax.random.fold_in(ks[1], k * NH + j),
                                      (B,), 0, num_cl[k][j])
                   for j in range(NH)], axis=1)
        for k in range(K)
    ])                                                              # (K, B, 3)

    # encoder params (PyTorch Linear init: U(-1/sqrt(fan_in), 1/sqrt(fan_in)))
    senc = 1.0 / jnp.sqrt(G)
    Wenc = jax.random.uniform(ks[2], (G, H), jnp.float32, -senc, senc)
    benc = jax.random.uniform(ks[3], (1, H), jnp.float32, -senc, senc)

    # head params, zero-padded to (K, 3, H, Npad) / (K, 3, Npad)
    sh = 1.0 / jnp.sqrt(H)
    Wheads = jnp.zeros((K, NH, H, Npad), jnp.float32)
    bheads = jnp.zeros((K, NH, Npad), jnp.float32)
    for k in range(K):
        for j in range(NH):
            n = num_cl[k][j]
            kk = jax.random.fold_in(ks[4], k * NH + j)
            kw, kb = jax.random.split(kk)
            Wheads = Wheads.at[k, j, :, :n].set(
                jax.random.uniform(kw, (H, n), jnp.float32, -sh, sh))
            bheads = bheads.at[k, j, :n].set(
                jax.random.uniform(kb, (n,), jnp.float32, -sh, sh))

    # pack: lane-dense per-block head weights, shifted labels, row weights
    T = choose_tasks_per_block(K, B)              # K=6, B=8 -> T=3, 2 blocks
    packed = pack_mtclf_inputs(X, Wenc, benc, Wheads, bheads, y, num_cl,
                               Npad, T)

    loss = mtclf_forward(*packed, tasks_per_block=T)
    loss = jax.block_until_ready(loss)

    ref = ref_forward(X, Wenc, benc, Wheads, bheads, y, num_cl)
    # bf16 matmul operands (f32 accumulation) -> relaxed tolerance vs f32 ref
    assert jnp.allclose(loss, ref, rtol=5e-3, atol=5e-3), (loss, ref)

    print("KERNEL_OK")
</pallas_src>

<mosaic_0001>
module attributes {stable_mosaic.version = 11 : i64} {
  func.func @mtclf_block_kernel(%arg0: i32, %arg1: memref<1x24x16xbf16, #tpu.memory_space<vmem>>, %arg2: memref<16x256xbf16, #tpu.memory_space<vmem>>, %arg3: memref<1x256xf32, #tpu.memory_space<vmem>>, %arg4: memref<1x256x72xbf16, #tpu.memory_space<vmem>>, %arg5: memref<1x1x72xf32, #tpu.memory_space<vmem>>, %arg6: memref<1x3x1x72xf32, #tpu.memory_space<vmem>>, %arg7: memref<1x24x4xi32, #tpu.memory_space<vmem>>, %arg8: memref<1x24x1xf32, #tpu.memory_space<vmem>>, %arg9: memref<1x8x128xf32, #tpu.memory_space<vmem>>) attributes {dimension_semantics = [#tpu.dimension_semantics<parallel>], iteration_bounds = array<i64: 2>, scalar_prefetch = 0 : i64, scratch_operands = 0 : i64, tpu.core_type = #tpu.core_type<tc>, window_params = [{transform_indices = @transform_0, window_bounds = array<i64: 1, 24, 16>}, {pipeline_mode = #tpu.pipeline_mode<synchronous>, transform_indices = @transform_1, window_bounds = array<i64: 16, 256>}, {pipeline_mode = #tpu.pipeline_mode<synchronous>, transform_indices = @transform_2, window_bounds = array<i64: 1, 256>}, {transform_indices = @transform_3, window_bounds = array<i64: 1, 256, 72>}, {transform_indices = @transform_4, window_bounds = array<i64: 1, 1, 72>}, {transform_indices = @transform_5, window_bounds = array<i64: 1, 3, 1, 72>}, {transform_indices = @transform_6, window_bounds = array<i64: 1, 24, 4>}, {transform_indices = @transform_7, window_bounds = array<i64: 1, 24, 1>}, {transform_indices = @transform_8, window_bounds = array<i64: 1, 8, 128>}]} {
    %c0 = arith.constant 0 : index
    %c0_0 = arith.constant 0 : index
    %c0_1 = arith.constant 0 : index
    %0 = vector.load %arg1[%c0, %c0_0, %c0_1] : memref<1x24x16xbf16, #tpu.memory_space<vmem>>, vector<1x24x16xbf16>
    %1 = vector.shape_cast %0 : vector<1x24x16xbf16> to vector<24x16xbf16>
    %c0_2 = arith.constant 0 : index
    %c0_3 = arith.constant 0 : index
    %2 = vector.load %arg2[%c0_2, %c0_3] : memref<16x256xbf16, #tpu.memory_space<vmem>>, vector<16x256xbf16>
    %cst = arith.constant dense<0.000000e+00> : vector<24x256xf32>
    %3 = tpu.matmul %1, %2, %cst {dimension_numbers = #tpu.dot_dimension_numbers<[1], [0], [0], [1], [0, 0, 1, 1], [], []>} : vector<24x16xbf16>, vector<16x256xbf16>, vector<24x256xf32> -> vector<24x256xf32>
    %c0_4 = arith.constant 0 : index
    %c0_5 = arith.constant 0 : index
    %4 = vector.load %arg3[%c0_4, %c0_5] : memref<1x256xf32, #tpu.memory_space<vmem>>, vector<1x256xf32>
    %5 = vector.broadcast %4 : vector<1x256xf32> to vector<24x256xf32>
    %6 = arith.addf %3, %5 : vector<24x256xf32>
    %7 = arith.negf %6 : vector<24x256xf32>
    %8 = math.exp %7 : vector<24x256xf32>
    %cst_6 = arith.constant 1.000000e+00 : f32
    %9 = vector.broadcast %cst_6 : f32 to vector<24x256xf32>
    %10 = arith.addf %9, %8 : vector<24x256xf32>
    %11 = arith.divf %9, %10 : vector<24x256xf32>
    %12 = arith.truncf %11 : vector<24x256xf32> to vector<24x256xbf16>
    %c0_7 = arith.constant 0 : index
    %c0_8 = arith.constant 0 : index
    %c0_9 = arith.constant 0 : index
    %13 = vector.load %arg4[%c0_7, %c0_8, %c0_9] : memref<1x256x72xbf16, #tpu.memory_space<vmem>>, vector<1x256x72xbf16>
    %14 = vector.shape_cast %13 : vector<1x256x72xbf16> to vector<256x72xbf16>
    %cst_10 = arith.constant dense<0.000000e+00> : vector<24x72xf32>
    %15 = tpu.matmul %12, %14, %cst_10 {dimension_numbers = #tpu.dot_dimension_numbers<[1], [0], [0], [1], [0, 0, 1, 1], [], []>} : vector<24x256xbf16>, vector<256x72xbf16>, vector<24x72xf32> -> vector<24x72xf32>
    %c0_11 = arith.constant 0 : index
    %c0_12 = arith.constant 0 : index
    %c0_13 = arith.constant 0 : index
    %16 = vector.load %arg5[%c0_11, %c0_12, %c0_13] : memref<1x1x72xf32, #tpu.memory_space<vmem>>, vector<1x1x72xf32>
    %17 = vector.shape_cast %16 : vector<1x1x72xf32> to vector<1x72xf32>
    %18 = vector.broadcast %17 : vector<1x72xf32> to vector<24x72xf32>
    %19 = arith.addf %15, %18 : vector<24x72xf32>
    %20 = arith.negf %19 : vector<24x72xf32>
    %21 = math.exp %20 : vector<24x72xf32>
    %cst_14 = arith.constant 1.000000e+00 : f32
    %22 = vector.broadcast %cst_14 : f32 to vector<24x72xf32>
    %23 = arith.addf %22, %21 : vector<24x72xf32>
    %24 = arith.divf %22, %23 : vector<24x72xf32>
    %25 = tpu.iota {dimensions = array<i32: 1>} : vector<24x72xi32>
    %c0_15 = arith.constant 0 : index
    %c0_16 = arith.constant 0 : index
    %c0_17 = arith.constant 0 : index
    %26 = vector.load %arg7[%c0_15, %c0_16, %c0_17] : memref<1x24x4xi32, #tpu.memory_space<vmem>>, vector<1x24x4xi32>
    %27 = vector.shape_cast %26 : vector<1x24x4xi32> to vector<24x4xi32>
    %28 = vector.extract_strided_slice %27 {offsets = [0, 3], sizes = [24, 1], strides = [1, 1]} : vector<24x4xi32> to vector<24x1xi32>
    %29 = vector.broadcast %28 : vector<24x1xi32> to vector<24x72xi32>
    %30 = arith.cmpi sge, %25, %29 : vector<24x72xi32>
    %c24_i32 = arith.constant 24 : i32
    %31 = vector.broadcast %c24_i32 : i32 to vector<24x1xi32>
    %32 = arith.addi %28, %31 : vector<24x1xi32>
    %33 = vector.broadcast %32 : vector<24x1xi32> to vector<24x72xi32>
    %34 = arith.cmpi slt, %25, %33 : vector<24x72xi32>
    %35 = arith.andi %30, %34 : vector<24x72xi1>
    %36 = math.exp %24 : vector<24x72xf32>
    %cst_18 = arith.constant 0.000000e+00 : f32
    %37 = vector.broadcast %cst_18 : f32 to vector<24x72xf32>
    %38 = arith.select %35, %36, %37 : vector<24x72xi1>, vector<24x72xf32>
    %c0_19 = arith.constant 0 : index
    %c0_20 = arith.constant 0 : index
    %c0_21 = arith.constant 0 : index
    %c0_22 = arith.constant 0 : index
    %39 = vector.load %arg6[%c0_19, %c0_20, %c0_21, %c0_22] : memref<1x3x1x72xf32, #tpu.memory_space<vmem>>, vector<1x3x1x72xf32>
    %40 = vector.shape_cast %39 : vector<1x3x1x72xf32> to vector<3x1x72xf32>
    %cst_23 = arith.constant 0.000000e+00 : f32
    %41 = vector.broadcast %cst_23 : f32 to vector<24x1xf32>
    %42 = vector.extract_strided_slice %40 {offsets = [0, 0, 0], sizes = [1, 1, 72], strides = [1, 1, 1]} : vector<3x1x72xf32> to vector<1x1x72xf32>
    %43 = vector.shape_cast %42 : vector<1x1x72xf32> to vector<1x72xf32>
    %44 = vector.broadcast %43 : vector<1x72xf32> to vector<24x72xf32>
    %45 = arith.mulf %38, %44 : vector<24x72xf32>
    %cst_24 = arith.constant dense<0.000000e+00> : vector<24xf32>
    %46 = vector.multi_reduction <add>, %45, %cst_24 [1] : vector<24x72xf32> to vector<24xf32>
    %47 = vector.shape_cast %46 : vector<24xf32> to vector<24x1xf32>
    %48 = math.log %47 : vector<24x1xf32>
    %49 = arith.addf %41, %48 : vector<24x1xf32>
    %50 = vector.extract_strided_slice %40 {offsets = [1, 0, 0], sizes = [1, 1, 72], strides = [1, 1, 1]} : vector<3x1x72xf32> to vector<1x1x72xf32>
    %51 = vector.shape_cast %50 : vector<1x1x72xf32> to vector<1x72xf32>
    %52 = vector.broadcast %51 : vector<1x72xf32> to vector<24x72xf32>
    %53 = arith.mulf %38, %52 : vector<24x72xf32>
    %cst_25 = arith.constant dense<0.000000e+00> : vector<24xf32>
    %54 = vector.multi_reduction <add>, %53, %cst_25 [1] : vector<24x72xf32> to vector<24xf32>
    %55 = vector.shape_cast %54 : vector<24xf32> to vector<24x1xf32>
    %56 = math.log %55 : vector<24x1xf32>
    %57 = arith.addf %49, %56 : vector<24x1xf32>
    %58 = vector.extract_strided_slice %40 {offsets = [2, 0, 0], sizes = [1, 1, 72], strides = [1, 1, 1]} : vector<3x1x72xf32> to vector<1x1x72xf32>
    %59 = vector.shape_cast %58 : vector<1x1x72xf32> to vector<1x72xf32>
    %60 = vector.broadcast %59 : vector<1x72xf32> to vector<24x72xf32>
    %61 = arith.mulf %38, %60 : vector<24x72xf32>
    %cst_26 = arith.constant dense<0.000000e+00> : vector<24xf32>
    %62 = vector.multi_reduction <add>, %61, %cst_26 [1] : vector<24x72xf32> to vector<24xf32>
    %63 = vector.shape_cast %62 : vector<24xf32> to vector<24x1xf32>
    %64 = math.log %63 : vector<24x1xf32>
    %65 = arith.addf %57, %64 : vector<24x1xf32>
    %66 = vector.extract_strided_slice %27 {offsets = [0, 0], sizes = [24, 1], strides = [1, 1]} : vector<24x4xi32> to vector<24x1xi32>
    %67 = vector.broadcast %66 : vector<24x1xi32> to vector<24x72xi32>
    %68 = arith.cmpi eq, %25, %67 : vector<24x72xi32>
    %69 = vector.extract_strided_slice %27 {offsets = [0, 1], sizes = [24, 1], strides = [1, 1]} : vector<24x4xi32> to vector<24x1xi32>
    %70 = vector.broadcast %69 : vector<24x1xi32> to vector<24x72xi32>
    %71 = arith.cmpi eq, %25, %70 : vector<24x72xi32>
    %72 = arith.ori %68, %71 : vector<24x72xi1>
    %73 = vector.extract_strided_slice %27 {offsets = [0, 2], sizes = [24, 1], strides = [1, 1]} : vector<24x4xi32> to vector<24x1xi32>
    %74 = vector.broadcast %73 : vector<24x1xi32> to vector<24x72xi32>
    %75 = arith.cmpi eq, %25, %74 : vector<24x72xi32>
    %76 = arith.ori %72, %75 : vector<24x72xi1>
    %cst_27 = arith.constant 0.000000e+00 : f32
    %77 = vector.broadcast %cst_27 : f32 to vector<24x72xf32>
    %78 = arith.select %76, %24, %77 : vector<24x72xi1>, vector<24x72xf32>
    %cst_28 = arith.constant dense<0.000000e+00> : vector<24xf32>
    %79 = vector.multi_reduction <add>, %78, %cst_28 [1] : vector<24x72xf32> to vector<24xf32>
    %80 = vector.shape_cast %79 : vector<24xf32> to vector<24x1xf32>
    %c0_29 = arith.constant 0 : index
    %c0_30 = arith.constant 0 : index
    %c0_31 = arith.constant 0 : index
    %81 = vector.load %arg8[%c0_29, %c0_30, %c0_31] : memref<1x24x1xf32, #tpu.memory_space<vmem>>, vector<1x24x1xf32>
    %82 = vector.shape_cast %81 : vector<1x24x1xf32> to vector<24x1xf32>
    %83 = arith.subf %65, %80 : vector<24x1xf32>
    %84 = arith.mulf %82, %83 : vector<24x1xf32>
    %85 = vector.shape_cast %84 : vector<24x1xf32> to vector<1x24x1xf32>
    %cst_32 = arith.constant dense<0.000000e+00> : vector<1xf32>
    %86 = vector.multi_reduction <add>, %85, %cst_32 [1, 2] : vector<1x24x1xf32> to vector<1xf32>
    %87 = vector.shape_cast %86 : vector<1xf32> to vector<1x1x1xf32>
    %88 = vector.extract %87[0, 0, 0] : f32 from vector<1x1x1xf32>
    %89 = vector.broadcast %88 : f32 to vector<1x8x128xf32>
    %c0_33 = arith.constant 0 : index
    %c0_34 = arith.constant 0 : index
    %c0_35 = arith.constant 0 : index
    %90 = vector.load %arg9[%c0_33, %c0_34, %c0_35] : memref<1x8x128xf32, #tpu.memory_space<vmem>>, vector<1x8x128xf32>
    tpu.vector_store %arg9[%c0_33, %c0_34, %c0_35], %89 {strides = array<i32>} : memref<1x8x128xf32, #tpu.memory_space<vmem>>, vector<1x8x128xf32>,
    return
  }
  func.func @transform_0(%arg0: i32) -> (i32, i32, i32) {
    %c0_i32 = arith.constant 0 : i32
    %c0_i32_0 = arith.constant 0 : i32
    %c0_i32_1 = arith.constant 0 : i32
    return %arg0, %c0_i32, %c0_i32_0 : i32, i32, i32
  }
  func.func @transform_1(%arg0: i32) -> (i32, i32) {
    %c0_i32 = arith.constant 0 : i32
    %c0_i32_0 = arith.constant 0 : i32
    %c0_i32_1 = arith.constant 0 : i32
    return %c0_i32, %c0_i32_0 : i32, i32
  }
  func.func @transform_2(%arg0: i32) -> (i32, i32) {
    %c0_i32 = arith.constant 0 : i32
    %c0_i32_0 = arith.constant 0 : i32
    %c0_i32_1 = arith.constant 0 : i32
    return %c0_i32, %c0_i32_0 : i32, i32
  }
  func.func @transform_3(%arg0: i32) -> (i32, i32, i32) {
    %c0_i32 = arith.constant 0 : i32
    %c0_i32_0 = arith.constant 0 : i32
    %c0_i32_1 = arith.constant 0 : i32
    return %arg0, %c0_i32, %c0_i32_0 : i32, i32, i32
  }
  func.func @transform_4(%arg0: i32) -> (i32, i32, i32) {
    %c0_i32 = arith.constant 0 : i32
    %c0_i32_0 = arith.constant 0 : i32
    %c0_i32_1 = arith.constant 0 : i32
    return %arg0, %c0_i32, %c0_i32_0 : i32, i32, i32
  }
  func.func @transform_5(%arg0: i32) -> (i32, i32, i32, i32) {
    %c0_i32 = arith.constant 0 : i32
    %c0_i32_0 = arith.constant 0 : i32
    %c0_i32_1 = arith.constant 0 : i32
    %c0_i32_2 = arith.constant 0 : i32
    return %arg0, %c0_i32, %c0_i32_0, %c0_i32_1 : i32, i32, i32, i32
  }
  func.func @transform_6(%arg0: i32) -> (i32, i32, i32) {
    %c0_i32 = arith.constant 0 : i32
    %c0_i32_0 = arith.constant 0 : i32
    %c0_i32_1 = arith.constant 0 : i32
    return %arg0, %c0_i32, %c0_i32_0 : i32, i32, i32
  }
  func.func @transform_7(%arg0: i32) -> (i32, i32, i32) {
    %c0_i32 = arith.constant 0 : i32
    %c0_i32_0 = arith.constant 0 : i32
    %c0_i32_1 = arith.constant 0 : i32
    return %arg0, %c0_i32, %c0_i32_0 : i32, i32, i32
  }
  func.func @transform_8(%arg0: i32) -> (i32, i32, i32) {
    %c0_i32 = arith.constant 0 : i32
    %c0_i32_0 = arith.constant 0 : i32
    %c0_i32_1 = arith.constant 0 : i32
    return %arg0, %c0_i32, %c0_i32_0 : i32, i32, i32
  }
}

</mosaic_0001>

<llo_original>
// kernel: mtclf_forward.1
$region0: #{mtclf_forward.1}
  #allocation0 [shape = 'u32[]', space=smem, size = 0x4, offset = 0x4, fixed_abs, tag = 'smem constant byte address 0x4 - core index']
  #allocation1 [shape = 'u32[144,128]{1,0:T(1,128)}', space=vmem, size = 0x12000, scoped, tag = 'internal scratch']
  %s0 = inlined_call_operand.vmem [shape: bf16[2,24,16], index: 0, kind: input, shape index: {}]
  %s1 = inlined_call_operand.vmem [shape: bf16[16,256], index: 1, kind: input, shape index: {}]
  %s2 = inlined_call_operand.vmem [shape: f32[1,256], index: 2, kind: input, shape index: {}]
  %s3 = inlined_call_operand.vmem [shape: bf16[2,256,72], index: 3, kind: input, shape index: {}]
  %s4 = inlined_call_operand.vmem [shape: f32[2,1,72], index: 4, kind: input, shape index: {}]
  %s5 = inlined_call_operand.vmem [shape: f32[2,3,1,72], index: 5, kind: input, shape index: {}]
  %s6 = inlined_call_operand.vmem [shape: s32[2,24,4], index: 6, kind: input, shape index: {}]
  %s7 = inlined_call_operand.vmem [shape: f32[2,24,1], index: 7, kind: input, shape index: {}]
  %s8 = inlined_call_operand.vmem [shape: f32[2,8,128], index: 8, kind: output, shape index: {}]
  %s9 = sld [smem:[#allocation0]]
  $region65: #{mtclf_forward.1} parent=0
    _
  %s11 = ssub.s32 1, %s9
  %s12 = scalar_select 0, %s11, %s9
  loop: start=0, step=1, limit=4
  $region2: #{mtclf_forward.1} parent=0 // loop_pre_header
    _
  $region3: #{mtclf_forward.1} parent=0 // loop_header
    %s14 = sphi 0, %s18
    %p15 = scmp.ge.s32.totalorder %s14, 4
    %s24 = sphi 0, %s26
    %s27 = sphi 0, %s24
    %s28 = sphi 0, %s27
    %s44 = sphi 0, %s28
    %s48 = sphi 0, %s48
    %s50 = sphi 0, %s48
    %s51 = sphi 0, %s50
    %s65 = sphi 0, %s51
    %s69 = sphi 0, %s69
    %s71 = sphi 0, %s69
    %s72 = sphi 0, %s71
    %s86 = sphi 0, %s72
    %s92 = sphi 0, %s94
    %s95 = sphi 0, %s92
    %s96 = sphi 0, %s95
    %s112 = sphi 0, %s96
    %s118 = sphi 0, %s120
    %s121 = sphi 0, %s118
    %s122 = sphi 0, %s121
    %s138 = sphi 0, %s122
    %s144 = sphi 0, %s146
    %s147 = sphi 0, %s144
    %s148 = sphi 0, %s147
    %s164 = sphi 0, %s148
    %s170 = sphi 0, %s172
    %s173 = sphi 0, %s170
    %s174 = sphi 0, %s173
    %s190 = sphi 0, %s174
    %s196 = sphi 0, %s198
    %s199 = sphi 0, %s196
    %s200 = sphi 0, %s199
    %s216 = sphi 0, %s200
    %s222 = sphi 0, %s224
    %s225 = sphi 0, %s222
    %s226 = sphi 0, %s225
    %s242 = sphi 0, %s226
  $region4: #{mtclf_forward.1} parent=0 // loop_header_branch
    %17 = sbr.rel (%p15) target = $region8
  $region5: #{mtclf_forward.1} parent=0 // loop_body
    %s19 = ssub.s32 %s14, 1
    %s20 = ssub.s32 %s14, 2
    %s21 = sadd.s32 %s14, 1
    %s22 = ssub.s32 %s14, %s21
    %p23 = scmp.eq.s32.totalorder %s22, 0
    %s25 = sadd.s32 %s24, 1
    %s26 = scalar_select %p23, %s24, %s25
    %p29 = pneg %p23
    %p30 = scmp.eq.s32.totalorder %s14, 1
    %p31 = por %p29, %p30
    %p32 = scmp.ne.s32.totalorder %s24, %s27
    %p33 = scmp.eq.s32.totalorder %s14, 0
    %p34 = por %p32, %p33
    %p35 = scmp.ne.s32.totalorder %s24, %s27
    %p36 = scmp.eq.s32.totalorder %s19, 1
    %p37 = por %p35, %p36
    %p38 = scmp.ne.s32.totalorder %s27, %s28
    %p39 = scmp.eq.s32.totalorder %s19, 0
    %p40 = por %p38, %p39
    %p41 = scmp.ne.s32.totalorder %s27, %s28
    %p42 = scmp.eq.s32.totalorder %s20, 1
    %p43 = por %p41, %p42
    %p45 = scmp.ne.s32.totalorder %s28, %s44
    %p46 = scmp.eq.s32.totalorder %s20, 0
    %p47 = por %p45, %p46
    %s49 = sadd.s32 %s48, 1
    %p52 = scmp.eq.s32.totalorder %s14, 1
    %p53 = scmp.ne.s32.totalorder %s48, %s50
    %p54 = scmp.eq.s32.totalorder %s14, 0
    %p55 = por %p53, %p54
    %p56 = scmp.ne.s32.totalorder %s48, %s50
    %p57 = scmp.eq.s32.totalorder %s19, 1
    %p58 = por %p56, %p57
    %p59 = scmp.ne.s32.totalorder %s50, %s51
    %p60 = scmp.eq.s32.totalorder %s19, 0
    %p61 = por %p59, %p60
    %p62 = scmp.ne.s32.totalorder %s50, %s51
    %p63 = scmp.eq.s32.totalorder %s20, 1
    %p64 = por %p62, %p63
    %p66 = scmp.ne.s32.totalorder %s51, %s65
    %p67 = scmp.eq.s32.totalorder %s20, 0
    %p68 = por %p66, %p67
    %s70 = sadd.s32 %s69, 1
    %p73 = scmp.eq.s32.totalorder %s14, 1
    %p74 = scmp.ne.s32.totalorder %s69, %s71
    %p75 = scmp.eq.s32.totalorder %s14, 0
    %p76 = por %p74, %p75
    %p77 = scmp.ne.s32.totalorder %s69, %s71
    %p78 = scmp.eq.s32.totalorder %s19, 1
    %p79 = por %p77, %p78
    %p80 = scmp.ne.s32.totalorder %s71, %s72
    %p81 = scmp.eq.s32.totalorder %s19, 0
    %p82 = por %p80, %p81
    %p83 = scmp.ne.s32.totalorder %s71, %s72
    %p84 = scmp.eq.s32.totalorder %s20, 1
    %p85 = por %p83, %p84
    %p87 = scmp.ne.s32.totalorder %s72, %s86
    %p88 = scmp.eq.s32.totalorder %s20, 0
    %p89 = por %p87, %p88
    %s90 = ssub.s32 %s14, %s21
    %p91 = scmp.eq.s32.totalorder %s90, 0
    %s93 = sadd.s32 %s92, 1
    %s94 = scalar_select %p91, %s92, %s93
    %p97 = pneg %p91
    %p98 = scmp.eq.s32.totalorder %s14, 1
    %p99 = por %p97, %p98
    %p100 = scmp.ne.s32.totalorder %s92, %s95
    %p101 = scmp.eq.s32.totalorder %s14, 0
    %p102 = por %p100, %p101
    %p103 = scmp.ne.s32.totalorder %s92, %s95
    %p104 = scmp.eq.s32.totalorder %s19, 1
    %p105 = por %p103, %p104
    %p106 = scmp.ne.s32.totalorder %s95, %s96
    %p107 = scmp.eq.s32.totalorder %s19, 0
    %p108 = por %p106, %p107
    %p109 = scmp.ne.s32.totalorder %s95, %s96
    %p110 = scmp.eq.s32.totalorder %s20, 1
    %p111 = por %p109, %p110
    %p113 = scmp.ne.s32.totalorder %s96, %s112
    %p114 = scmp.eq.s32.totalorder %s20, 0
    %p115 = por %p113, %p114
    %s116 = ssub.s32 %s14, %s21
    %p117 = scmp.eq.s32.totalorder %s116, 0
    %s119 = sadd.s32 %s118, 1
    %s120 = scalar_select %p117, %s118, %s119
    %p123 = pneg %p117
    %p124 = scmp.eq.s32.totalorder %s14, 1
    %p125 = por %p123, %p124
    %p126 = scmp.ne.s32.totalorder %s118, %s121
    %p127 = scmp.eq.s32.totalorder %s14, 0
    %p128 = por %p126, %p127
    %p129 = scmp.ne.s32.totalorder %s118, %s121
    %p130 = scmp.eq.s32.totalorder %s19, 1
    %p131 = por %p129, %p130
    %p132 = scmp.ne.s32.totalorder %s121, %s122
    %p133 = scmp.eq.s32.totalorder %s19, 0
    %p134 = por %p132, %p133
    %p135 = scmp.ne.s32.totalorder %s121, %s122
    %p136 = scmp.eq.s32.totalorder %s20, 1
    %p137 = por %p135, %p136
    %p139 = scmp.ne.s32.totalorder %s122, %s138
    %p140 = scmp.eq.s32.totalorder %s20, 0
    %p141 = por %p139, %p140
    %s142 = ssub.s32 %s14, %s21
    %p143 = scmp.eq.s32.totalorder %s142, 0
    %s145 = sadd.s32 %s144, 1
    %s146 = scalar_select %p143, %s144, %s145
    %p149 = pneg %p143
    %p150 = scmp.eq.s32.totalorder %s14, 1
    %p151 = por %p149, %p150
    %p152 = scmp.ne.s32.totalorder %s144, %s147
    %p153 = scmp.eq.s32.totalorder %s14, 0
    %p154 = por %p152, %p153
    %p155 = scmp.ne.s32.totalorder %s144, %s147
    %p156 = scmp.eq.s32.totalorder %s19, 1
    %p157 = por %p155, %p156
    %p158 = scmp.ne.s32.totalorder %s147, %s148
    %p159 = scmp.eq.s32.totalorder %s19, 0
    %p160 = por %p158, %p159
    %p161 = scmp.ne.s32.totalorder %s147, %s148
    %p162 = scmp.eq.s32.totalorder %s20, 1
    %p163 = por %p161, %p162
    %p165 = scmp.ne.s32.totalorder %s148, %s164
    %p166 = scmp.eq.s32.totalorder %s20, 0
    %p167 = por %p165, %p166
    %s168 = ssub.s32 %s14, %s21
    %p169 = scmp.eq.s32.totalorder %s168, 0
    %s171 = sadd.s32 %s170, 1
    %s172 = scalar_select %p169, %s170, %s171
    %p175 = pneg %p169
    %p176 = scmp.eq.s32.totalorder %s14, 1
    %p177 = por %p175, %p176
    %p178 = scmp.ne.s32.totalorder %s170, %s173
    %p179 = scmp.eq.s32.totalorder %s14, 0
    %p180 = por %p178, %p179
    %p181 = scmp.ne.s32.totalorder %s170, %s173
    %p182 = scmp.eq.s32.totalorder %s19, 1
    %p183 = por %p181, %p182
    %p184 = scmp.ne.s32.totalorder %s173, %s174
    %p185 = scmp.eq.s32.totalorder %s19, 0
    %p186 = por %p184, %p185
    %p187 = scmp.ne.s32.totalorder %s173, %s174
    %p188 = scmp.eq.s32.totalorder %s20, 1
    %p189 = por %p187, %p188
    %p191 = scmp.ne.s32.totalorder %s174, %s190
    %p192 = scmp.eq.s32.totalorder %s20, 0
    %p193 = por %p191, %p192
    %s194 = ssub.s32 %s14, %s21
    %p195 = scmp.eq.s32.totalorder %s194, 0
    %s197 = sadd.s32 %s196, 1
    %s198 = scalar_select %p195, %s196, %s197
    %p201 = pneg %p195
    %p202 = scmp.eq.s32.totalorder %s14, 1
    %p203 = por %p201, %p202
    %p204 = scmp.ne.s32.totalorder %s196, %s199
    %p205 = scmp.eq.s32.totalorder %s14, 0
    %p206 = por %p204, %p205
    %p207 = scmp.ne.s32.totalorder %s196, %s199
    %p208 = scmp.eq.s32.totalorder %s19, 1
    %p209 = por %p207, %p208
    %p210 = scmp.ne.s32.totalorder %s199, %s200
    %p211 = scmp.eq.s32.totalorder %s19, 0
    %p212 = por %p210, %p211
    %p213 = scmp.ne.s32.totalorder %s199, %s200
    %p214 = scmp.eq.s32.totalorder %s20, 1
    %p215 = por %p213, %p214
    %p217 = scmp.ne.s32.totalorder %s200, %s216
    %p218 = scmp.eq.s32.totalorder %s20, 0
    %p219 = por %p217, %p218
    %s220 = ssub.s32 %s14, %s21
    %p221 = scmp.eq.s32.totalorder %s220, 0
    %s223 = sadd.s32 %s222, 1
    %s224 = scalar_select %p221, %s222, %s223
    %p227 = pneg %p221
    %p228 = scmp.eq.s32.totalorder %s14, 1
    %p229 = por %p227, %p228
    %p230 = scmp.ne.s32.totalorder %s222, %s225
    %p231 = scmp.eq.s32.totalorder %s14, 0
    %p232 = por %p230, %p231
    %p233 = scmp.ne.s32.totalorder %s222, %s225
    %p234 = scmp.eq.s32.totalorder %s19, 1
    %p235 = por %p233, %p234
    %p236 = scmp.ne.s32.totalorder %s225, %s226
    %p237 = scmp.eq.s32.totalorder %s19, 0
    %p238 = por %p236, %p237
    %p239 = scmp.ne.s32.totalorder %s225, %s226
    %p240 = scmp.eq.s32.totalorder %s20, 1
    %p241 = por %p239, %p240
    %p243 = scmp.ne.s32.totalorder %s226, %s242
    %p244 = scmp.eq.s32.totalorder %s20, 0
    %p245 = por %p243, %p244
    %p246 = scmp.le.s32.totalorder 1, %s14
    %p247 = scmp.lt.s32.totalorder %s14, 3
    %p248 = pnand %p246, %p247
    %p249 = pneg %p248
    // Predicated region
    $region9: #{mtclf_forward.1} parent=5 // pred_check
      _
    $region10: #{mtclf_forward.1} parent=5 // pred_check_branch
      %251 = sbr.rel (%p248) target = $region12
    $region11: #{mtclf_forward.1} parent=5 // pred_region
      %s252 = ssub.s32 %s14, 1
      // Predicated region
      $region13: #{mtclf_forward.1} parent=11 // pred_check
        %p253 = pneg %p61
      $region14: #{mtclf_forward.1} parent=11 // pred_check_branch
        %255 = sbr.rel (%p253) target = $region16
      $region15: #{mtclf_forward.1} parent=11 // pred_region
        _
      $region16: #{mtclf_forward.1} parent=11 // pred_fallthru
        _
      // Predicated region
      $region17: #{mtclf_forward.1} parent=11 // pred_check
        %p256 = pneg %p82
      $region18: #{mtclf_forward.1} parent=11 // pred_check_branch
        %258 = sbr.rel (%p256) target = $region20
      $region19: #{mtclf_forward.1} parent=11 // pred_region
        _
      $region20: #{mtclf_forward.1} parent=11 // pred_fallthru
        _
    $region12: #{mtclf_forward.1} parent=5 // pred_fallthru
      _
    %p259 = scmp.lt.s32.totalorder %s14, 2
    // Predicated region
    $region21: #{mtclf_forward.1} parent=5 // pred_check
      %p260 = pneg %p259
    $region22: #{mtclf_forward.1} parent=5 // pred_check_branch
      %262 = sbr.rel (%p260) target = $region24
    $region23: #{mtclf_forward.1} parent=5 // pred_region
      // Predicated region
      $region25: #{mtclf_forward.1} parent=23 // pred_check
        %p263 = pneg %p34
      $region26: #{mtclf_forward.1} parent=23 // pred_check_branch
        %265 = sbr.rel (%p263) target = $region28
      $region27: #{mtclf_forward.1} parent=23 // pred_region
        %p266 = scmp.lt.s32.totalorder %s14, 1
        %s267 = scalar_select %p266, %s14, 1
        %s268 = smul.addr %s267, 3
        %s269 = smul.addr %s268, 4
        %s270 = scalar_lea.vmem %s0, %s269
      $region28: #{mtclf_forward.1} parent=23 // pred_fallthru
        _
      // Predicated region
      $region29: #{mtclf_forward.1} parent=23 // pred_check
        %p271 = pneg %p102
      $region30: #{mtclf_forward.1} parent=23 // pred_check_branch
        %273 = sbr.rel (%p271) target = $region32
      $region31: #{mtclf_forward.1} parent=23 // pred_region
        %p274 = scmp.lt.s32.totalorder %s14, 1
        %s275 = scalar_select %p274, %s14, 1
        %s276 = smul.addr %s275, 32
        %s277 = smul.addr %s276, 4
        %s278 = scalar_lea.vmem %s3, %s277
      $region32: #{mtclf_forward.1} parent=23 // pred_fallthru
        _
      // Predicated region
      $region33: #{mtclf_forward.1} parent=23 // pred_check
        %p279 = pneg %p128
      $region34: #{mtclf_forward.1} parent=23 // pred_check_branch
        %281 = sbr.rel (%p279) target = $region36
      $region35: #{mtclf_forward.1} parent=23 // pred_region
        %p282 = scmp.lt.s32.totalorder %s14, 1
        %s283 = scalar_select %p282, %s14, 1
        %s284 = scalar_lea.vmem %s4, %s283
      $region36: #{mtclf_forward.1} parent=23 // pred_fallthru
        _
      // Predicated region
      $region37: #{mtclf_forward.1} parent=23 // pred_check
        %p285 = pneg %p154
      $region38: #{mtclf_forward.1} parent=23 // pred_check_branch
        %287 = sbr.rel (%p285) target = $region40
      $region39: #{mtclf_forward.1} parent=23 // pred_region
        %p288 = scmp.lt.s32.totalorder %s14, 1
        %s289 = scalar_select %p288, %s14, 1
        %s290 = smul.addr %s289, 3
        %s291 = scalar_lea.vmem %s5, %s290
      $region40: #{mtclf_forward.1} parent=23 // pred_fallthru
        _
      // Predicated region
      $region41: #{mtclf_forward.1} parent=23 // pred_check
        %p292 = pneg %p180
      $region42: #{mtclf_forward.1} parent=23 // pred_check_branch
        %294 = sbr.rel (%p292) target = $region44
      $region43: #{mtclf_forward.1} parent=23 // pred_region
        %p295 = scmp.lt.s32.totalorder %s14, 1
        %s296 = scalar_select %p295, %s14, 1
        %s297 = smul.addr %s296, 3
        %s298 = smul.addr %s297, 8
        %s299 = scalar_lea.vmem %s6, %s298
      $region44: #{mtclf_forward.1} parent=23 // pred_fallthru
        _
      // Predicated region
      $region45: #{mtclf_forward.1} parent=23 // pred_check
        %p300 = pneg %p206
      $region46: #{mtclf_forward.1} parent=23 // pred_check_branch
        %302 = sbr.rel (%p300) target = $region48
      $region47: #{mtclf_forward.1} parent=23 // pred_region
        %p303 = scmp.lt.s32.totalorder %s14, 1
        %s304 = scalar_select %p303, %s14, 1
        %s305 = smul.addr %s304, 3
        %s306 = smul.addr %s305, 8
        %s307 = scalar_lea.vmem %s7, %s306
      $region48: #{mtclf_forward.1} parent=23 // pred_fallthru
        _
    $region24: #{mtclf_forward.1} parent=5 // pred_fallthru
      _
    %p308 = scmp.le.s32.totalorder 1, %s14
    %p309 = scmp.lt.s32.totalorder %s14, 3
    %p310 = pnand %p308, %p309
    %p311 = pneg %p310
    // Predicated region
    $region49: #{mtclf_forward.1} parent=5 // pred_check
      _
    $region50: #{mtclf_forward.1} parent=5 // pred_check_branch
      %313 = sbr.rel (%p310) target = $region52
    $region51: #{mtclf_forward.1} parent=5 // pred_region
      %s314 = ssub.s32 %s14, 1
      %p315 = scmp.lt.s32.totalorder %s19, 1
      %s316 = scalar_select %p315, %s19, 1
      %s317 = smul.addr %s316, 3
      %s318 = smul.addr %s317, 4
      %s319 = scalar_lea.vmem %s0, %s318
      %p320 = pneg %p40
      %p321 = pneg %p37
      %p322 = pneg %p61
      %p323 = pneg %p58
      %p324 = pneg %p82
      %p325 = pneg %p79
      %p326 = scmp.lt.s32.totalorder %s19, 1
      %s327 = scalar_select %p326, %s19, 1
      %s328 = smul.addr %s327, 32
      %s329 = smul.addr %s328, 4
      %s330 = scalar_lea.vmem %s3, %s329
      %p331 = pneg %p108
      %p332 = pneg %p105
      %p333 = scmp.lt.s32.totalorder %s19, 1
      %s334 = scalar_select %p333, %s19, 1
      %s335 = scalar_lea.vmem %s4, %s334
      %p336 = pneg %p134
      %p337 = pneg %p131
      %p338 = scmp.lt.s32.totalorder %s19, 1
      %s339 = scalar_select %p338, %s19, 1
      %s340 = smul.addr %s339, 3
      %s341 = scalar_lea.vmem %s5, %s340
      %p342 = pneg %p160
      %p343 = pneg %p157
      %p344 = scmp.lt.s32.totalorder %s19, 1
      %s345 = scalar_select %p344, %s19, 1
      %s346 = smul.addr %s345, 3
      %s347 = smul.addr %s346, 8
      %s348 = scalar_lea.vmem %s6, %s347
      %p349 = pneg %p186
      %p350 = pneg %p183
      %p351 = scmp.lt.s32.totalorder %s19, 1
      %s352 = scalar_select %p351, %s19, 1
      %s353 = smul.addr %s352, 3
      %s354 = smul.addr %s353, 8
      %s355 = scalar_lea.vmem %s7, %s354
      %p356 = pneg %p212
      %p357 = pneg %p209
      %p358 = pneg %p238
      %p359 = pneg %p235
      %p360 = scmp.lt.s32.totalorder %s19, 1
      %s361 = scalar_select %p360, %s19, 1
      %s362 = smul.addr %s361, 8
      %s363 = scalar_lea.vmem %s8, %s362
      %p364 = scmp.lt.s32.totalorder %s19, 1
      %s365 = scalar_select %p364, %s19, 1
      %s366 = smul.addr %s365, 3
      %s367 = smul.addr %s366, 4
      %s368 = scalar_lea.vmem %s0, %s367
      %p369 = scmp.lt.s32.totalorder %s19, 1
      %s370 = scalar_select %p369, %s19, 1
      %s371 = smul.addr %s370, 32
      %s372 = smul.addr %s371, 4
      %s373 = scalar_lea.vmem %s3, %s372
      %p374 = scmp.lt.s32.totalorder %s19, 1
      %s375 = scalar_select %p374, %s19, 1
      %s376 = scalar_lea.vmem %s4, %s375
      %p377 = scmp.lt.s32.totalorder %s19, 1
      %s378 = scalar_select %p377, %s19, 1
      %s379 = smul.addr %s378, 3
      %s380 = scalar_lea.vmem %s5, %s379
      %p381 = scmp.lt.s32.totalorder %s19, 1
      %s382 = scalar_select %p381, %s19, 1
      %s383 = smul.addr %s382, 3
      %s384 = smul.addr %s383, 8
      %s385 = scalar_lea.vmem %s6, %s384
      %p386 = scmp.lt.s32.totalorder %s19, 1
      %s387 = scalar_select %p386, %s19, 1
      %s388 = smul.addr %s387, 3
      %s389 = smul.addr %s388, 8
      %s390 = scalar_lea.vmem %s7, %s389
      %p391 = scmp.lt.s32.totalorder %s19, 1
      %s392 = scalar_select %p391, %s19, 1
      %s393 = smul.addr %s392, 8
      %s394 = scalar_lea.vmem %s8, %s393
      %v396 = vld [vmem:[%s368] sm:$0xf]
      %v397 = vld [vmem:[%s368 + $0x4] sm:$0xf]
      %v398 = vld [vmem:[%s368 + $0x8] sm:$0xf]
      %v399 = vld [vmem:[%s1] sm:$0xff]
      %v400 = vld [vmem:[%s1 + $0x8] sm:$0xff]
      %v401 = vld [vmem:[%s2] sm:$0x3]
      %v403 = vlaneseq
      %v404 = vshrl.u32 %v403, 7
      %v405 = vsub.s32 0, %v404
      %v406 = vrot.slane %v401, %v405
      %v407 = vlaneseq
      %v408 = vshrl.u32 %v407, 7
      %v409 = vsub.s32 1, %v408
      %v410 = vrot.slane %v401, %v409
      %v416 = vunpack.c.l.b16 %v396
      %v417 = vunpack.c.l.b16 %v397
      %v418 = vunpack.c.l.b16 %v398
      %v419 = vpack.c.b16 %v417, %v416
      %v420 = vpack.c.b16 %v418, %v418
      %v423 = vunpack.c.l.b16 %v399
      %v424 = vunpack.c.h.b16 %v399
      %v425 = vunpack.c.l.b16 %v400
      %v426 = vunpack.c.h.b16 %v400
      %v427 = vpack.c.b16 %v425, %v423
      %v428 = vpack.c.b16 %v426, %v424
      %vm431 = vcmask 130048
      %v433 = vsel %vm431, %v419, 0
      %v436 = vsel %vm431, %v420, 0
      %438 = vmatprep.subr.bf16.mxu0 %v428
      %439 = vmatpush1.bf16.msra.mxu0 %v427
      %440 = vmatprep.subr.bf16.mxu0 0
      %441 = vmatpush1.bf16.msra.mxu0 0
      %442 = vmatprep.subr.bf16.mxu0 0
      %443 = vmatpush1.bf16.msra.mxu0 0
      %444 = vmatprep.subr.bf16.mxu0 0
      %445 = vmatpush1.bf16.msra.mxu0 0
      %446 = vmatprep.subr.bf16.mxu0 0
      %447 = vmatpush1.bf16.msra.mxu0 0
      %448 = vmatprep.subr.bf16.mxu0 0
      %449 = vmatpush1.bf16.msra.mxu0 0
      %450 = vmatprep.subr.bf16.mxu0 0
      %451 = vmatpush1.bf16.msra.mxu0 0
      %452 = vmatprep.subr.bf16.mxu0 0
      %453 = vmatpush1.bf16.msra.mxu0 0
      %454 = vmatprep.subr.bf16.mxu0 0
      %455 = vmatpush1.bf16.msra.mxu0 0
      %456 = vmatprep.subr.bf16.mxu0 0
      %457 = vmatpush1.bf16.msra.mxu0 0
      %458 = vmatprep.subr.bf16.mxu0 0
      %459 = vmatpush1.bf16.msra.mxu0 0
      %460 = vmatprep.subr.bf16.mxu0 0
      %461 = vmatpush1.bf16.msra.mxu0 0
      %462 = vmatprep.subr.bf16.mxu0 0
      %463 = vmatpush1.bf16.msra.mxu0 0
      %464 = vmatprep.subr.bf16.mxu0 0
      %465 = vmatpush1.bf16.msra.mxu0 0
      %466 = vmatprep.subr.bf16.mxu0 0
      %467 = vmatpush1.bf16.msra.mxu0 0
      %468 = vmatprep.subr.bf16.mxu0 0
      %469 = vmatpush1.bf16.msra.mxu0 0
      %470 = vmatprep.mubr.bf16.mxu0 0
      %471 = vmatmul.mubr.bf16.gmra.mrb[0].mxu0 %v433
      %v472 = vpop.f32.mrb[0].mxu0
      %v473 = vadd.f32 %v406, %v472
      %v474 = vpop.f32.mrb[0].mxu0
      %v475 = vadd.f32 %v410, %v474
      %v476 = vpop.f32.mrb[0].mxu0
      %v477 = vadd.f32 %v406, %v476
      %v478 = vpop.f32.mrb[0].mxu0
      %v479 = vadd.f32 %v410, %v478
      %480 = vmatprep.mubr.bf16.mxu0 0
      %481 = vmatmul.mubr.bf16.gmra.mrb[0].mxu0 %v436
      %v482 = vpop.f32.mrb[0].mxu0
      %v483 = vadd.f32 %v406, %v482
      %v484 = vpop.f32.mrb[0].mxu0
      %v485 = vadd.f32 %v410, %v484
      %v486 = vpop.f32.mrb[0].mxu0
      %v487 = vpop.f32.mrb[0].mxu0
      %488 = vdwg.mxu0
      %v489 = vxor.u32 %v473, 2147483648
      %v490 = vxor.u32 %v475, 2147483648
      %v491 = vxor.u32 %v477, 2147483648
      %v492 = vxor.u32 %v479, 2147483648
      %v493 = vxor.u32 %v483, 2147483648
      %v494 = vxor.u32 %v485, 2147483648
      %v495 = vmul.f32 %v489, 1.442695
      %v496 = vpow.pop %v495
      %v497 = vmul.f32 %v490, 1.442695
      %v498 = vpow.pop %v497
      %v499 = vmul.f32 %v491, 1.442695
      %v500 = vpow.pop %v499
      %v501 = vmul.f32 %v492, 1.442695
      %v502 = vpow.pop %v501
      %v503 = vmul.f32 %v493, 1.442695
      %v504 = vpow.pop %v503
      %v505 = vmul.f32 %v494, 1.442695
      %v506 = vpow.pop %v505
      %v507 = vadd.f32 %v496, 1.0
      %v508 = vadd.f32 %v498, 1.0
      %v509 = vadd.f32 %v500, 1.0
      %v510 = vadd.f32 %v502, 1.0
      %v511 = vadd.f32 %v504, 1.0
      %v512 = vadd.f32 %v506, 1.0
      %v513 = vrcp.pop %v507
      %v514 = vmul.f32 1.0, %v513
      %v515 = vrcp.pop %v508
      %v516 = vmul.f32 1.0, %v515
      %v517 = vrcp.pop %v509
      %v518 = vmul.f32 1.0, %v517
      %v519 = vrcp.pop %v510
      %v520 = vmul.f32 1.0, %v519
      %v521 = vrcp.pop %v511
      %v522 = vmul.f32 1.0, %v521
      %v523 = vrcp.pop %v512
      %v524 = vmul.f32 1.0, %v523
      %v525 = vpack.c.bf16 %v518, %v514
      %v526 = vpack.c.bf16 %v520, %v516
      %v527 = vpack.c.bf16 %v522, %v522
      %v528 = vpack.c.bf16 %v524, %v524
      %v529 = vld [vmem:[%s373] sm:$0xf]
      %v530 = vld [vmem:[%s373 + $0x4] sm:$0xf]
      %v531 = vld [vmem:[%s373 + $0x8] sm:$0xf]
      %v532 = vld [vmem:[%s373 + $0xc] sm:$0xf]
      %v533 = vld [vmem:[%s373 + $0x10] sm:$0xf]
      %v534 = vld [vmem:[%s373 + $0x14] sm:$0xf]
      %v535 = vld [vmem:[%s373 + $0x18] sm:$0xf]
      %v536 = vld [vmem:[%s373 + $0x1c] sm:$0xf]
      %v537 = vld [vmem:[%s373 + $0x20] sm:$0xf]
      %v538 = vld [vmem:[%s373 + $0x24] sm:$0xf]
      %v539 = vld [vmem:[%s373 + $0x28] sm:$0xf]
      %v540 = vld [vmem:[%s373 + $0x2c] sm:$0xf]
      %v541 = vld [vmem:[%s373 + $0x30] sm:$0xf]
      %v542 = vld [vmem:[%s373 + $0x34] sm:$0xf]
      %v543 = vld [vmem:[%s373 + $0x38] sm:$0xf]
      %v544 = vld [vmem:[%s373 + $0x3c] sm:$0xf]
      %v545 = vld [vmem:[%s373 + $0x40] sm:$0xf]
      %v546 = vld [vmem:[%s373 + $0x44] sm:$0xf]
      %v547 = vld [vmem:[%s373 + $0x48] sm:$0xf]
      %v548 = vld [vmem:[%s373 + $0x4c] sm:$0xf]
      %v549 = vld [vmem:[%s373 + $0x50] sm:$0xf]
      %v550 = vld [vmem:[%s373 + $0x54] sm:$0xf]
      %v551 = vld [vmem:[%s373 + $0x58] sm:$0xf]
      %v552 = vld [vmem:[%s373 + $0x5c] sm:$0xf]
      %v553 = vld [vmem:[%s373 + $0x60] sm:$0xf]
      %v554 = vld [vmem:[%s373 + $0x64] sm:$0xf]
      %v555 = vld [vmem:[%s373 + $0x68] sm:$0xf]
      %v556 = vld [vmem:[%s373 + $0x6c] sm:$0xf]
      %v557 = vld [vmem:[%s373 + $0x70] sm:$0xf]
      %v558 = vld [vmem:[%s373 + $0x74] sm:$0xf]
      %v559 = vld [vmem:[%s373 + $0x78] sm:$0xf]
      %v560 = vld [vmem:[%s373 + $0x7c] sm:$0xf]
      %v561 = vld [vmem:[%s376] sm:$0x1]
      %v563 = vlaneseq
      %v564 = vshrl.u32 %v563, 7
      %v565 = vsub.s32 0, %v564
      %v566 = vrot.slane %v561, %v565
      %v600 = vunpack.c.l.b16 %v529
      %v601 = vunpack.c.l.b16 %v530
      %v602 = vunpack.c.l.b16 %v531
      %v603 = vunpack.c.l.b16 %v532
      %v604 = vunpack.c.l.b16 %v533
      %v605 = vunpack.c.l.b16 %v534
      %v606 = vunpack.c.l.b16 %v535
      %v607 = vunpack.c.l.b16 %v536
      %v608 = vunpack.c.l.b16 %v537
      %v609 = vunpack.c.l.b16 %v538
      %v610 = vunpack.c.l.b16 %v539
      %v611 = vunpack.c.l.b16 %v540
      %v612 = vunpack.c.l.b16 %v541
      %v613 = vunpack.c.l.b16 %v542
      %v614 = vunpack.c.l.b16 %v543
      %v615 = vunpack.c.l.b16 %v544
      %v616 = vunpack.c.l.b16 %v545
      %v617 = vunpack.c.l.b16 %v546
      %v618 = vunpack.c.l.b16 %v547
      %v619 = vunpack.c.l.b16 %v548
      %v620 = vunpack.c.l.b16 %v549
      %v621 = vunpack.c.l.b16 %v550
      %v622 = vunpack.c.l.b16 %v551
      %v623 = vunpack.c.l.b16 %v552
      %v624 = vunpack.c.l.b16 %v553
      %v625 = vunpack.c.l.b16 %v554
      %v626 = vunpack.c.l.b16 %v555
      %v627 = vunpack.c.l.b16 %v556
      %v628 = vunpack.c.l.b16 %v557
      %v629 = vunpack.c.l.b16 %v558
      %v630 = vunpack.c.l.b16 %v559
      %v631 = vunpack.c.l.b16 %v560
      %v632 = vpack.c.b16 %v601, %v600
      %v633 = vpack.c.b16 %v603, %v602
      %v634 = vpack.c.b16 %v605, %v604
      %v635 = vpack.c.b16 %v607, %v606
      %v636 = vpack.c.b16 %v609, %v608
      %v637 = vpack.c.b16 %v611, %v610
      %v638 = vpack.c.b16 %v613, %v612
      %v639 = vpack.c.b16 %v615, %v614
      %v640 = vpack.c.b16 %v617, %v616
      %v641 = vpack.c.b16 %v619, %v618
      %v642 = vpack.c.b16 %v621, %v620
      %v643 = vpack.c.b16 %v623, %v622
      %v644 = vpack.c.b16 %v625, %v624
      %v645 = vpack.c.b16 %v627, %v626
      %v646 = vpack.c.b16 %v629, %v628
      %v647 = vpack.c.b16 %v631, %v630
      %664 = vmatprep.subr.bf16.mxu0 0
      %665 = vmatpush1.bf16.msra.mxu0 %v632
      %666 = vmatprep.subr.bf16.mxu0 0
      %667 = vmatpush1.bf16.msra.mxu0 %v633
      %668 = vmatprep.subr.bf16.mxu0 0
      %669 = vmatpush1.bf16.msra.mxu0 %v634
      %670 = vmatprep.subr.bf16.mxu0 0
      %671 = vmatpush1.bf16.msra.mxu0 %v635
      %672 = vmatprep.subr.bf16.mxu0 0
      %673 = vmatpush1.bf16.msra.mxu0 %v636
      %674 = vmatprep.subr.bf16.mxu0 0
      %675 = vmatpush1.bf16.msra.mxu0 %v637
      %676 = vmatprep.subr.bf16.mxu0 0
      %677 = vmatpush1.bf16.msra.mxu0 %v638
      %678 = vmatprep.subr.bf16.mxu0 0
      %679 = vmatpush1.bf16.msra.mxu0 %v639
      %680 = vmatprep.subr.bf16.mxu0 0
      %681 = vmatpush1.bf16.msra.mxu0 %v640
      %682 = vmatprep.subr.bf16.mxu0 0
      %683 = vmatpush1.bf16.msra.mxu0 %v641
      %684 = vmatprep.subr.bf16.mxu0 0
      %685 = vmatpush1.bf16.msra.mxu0 %v642
      %686 = vmatprep.subr.bf16.mxu0 0
      %687 = vmatpush1.bf16.msra.mxu0 %v643
      %688 = vmatprep.subr.bf16.mxu0 0
      %689 = vmatpush1.bf16.msra.mxu0 %v644
      %690 = vmatprep.subr.bf16.mxu0 0
      %691 = vmatpush1.bf16.msra.mxu0 %v645
      %692 = vmatprep.subr.bf16.mxu0 0
      %693 = vmatpush1.bf16.msra.mxu0 %v646
      %694 = vmatprep.subr.bf16.mxu0 0
      %695 = vmatpush1.bf16.msra.mxu0 %v647
      %696 = vmatprep.mubr.bf16.mxu0 %v526
      %697 = vmatmul.mubr.bf16.gmra.mrb[0].mxu0 %v525
      %v698 = vpop.f32.mrb[0].mxu0
      %v699 = vadd.f32 %v566, %v698
      %v700 = vpop.f32.mrb[0].mxu0
      %v701 = vpop.f32.mrb[0].mxu0
      %v702 = vadd.f32 %v566, %v701
      %v703 = vpop.f32.mrb[0].mxu0
      %704 = vmatprep.mubr.bf16.mxu0 %v528
      %705 = vmatmul.mubr.bf16.gmra.mrb[0].mxu0 %v527
      %v706 = vpop.f32.mrb[0].mxu0
      %v707 = vadd.f32 %v566, %v706
      %v708 = vpop.f32.mrb[0].mxu0
      %v709 = vpop.f32.mrb[0].mxu0
      %v710 = vpop.f32.mrb[0].mxu0
      %711 = vdwg.mxu0
      %v712 = vxor.u32 %v699, 2147483648
      %v713 = vxor.u32 %v702, 2147483648
      %v714 = vxor.u32 %v707, 2147483648
      %v715 = vmul.f32 %v712, 1.442695
      %v716 = vpow.pop %v715
      %v717 = vmul.f32 %v713, 1.442695
      %v718 = vpow.pop %v717
      %v719 = vmul.f32 %v714, 1.442695
      %v720 = vpow.pop %v719
      %v721 = vadd.f32 %v716, 1.0
      %v722 = vadd.f32 %v718, 1.0
      %v723 = vadd.f32 %v720, 1.0
      %v724 = vrcp.pop %v721
      %v725 = vmul.f32 1.0, %v724
      %v726 = vrcp.pop %v722
      %v727 = vmul.f32 1.0, %v726
      %v728 = vrcp.pop %v723
      %v729 = vmul.f32 1.0, %v728
      %v730 = vlaneseq
      %v731 = vand.u32 %v730, 127
      %v732 = vld [vmem:[%s385] sm:$0xff]
      %v733 = vld [vmem:[%s385 + $0x8] sm:$0xff]
      %v734 = vld [vmem:[%s385 + $0x10] sm:$0xff]
      %735 = vset.pattern.permute.xlu0 3
      %736 = vperm.xlu0 %735, %v732
      %v737 = vpop.permute.xlu0 %736
      %738 = vset.pattern.permute.xlu0 3
      %739 = vperm.xlu0 %738, %v733
      %v740 = vpop.permute.xlu0 %739
      %741 = vset.pattern.permute.xlu0 3
      %742 = vperm.xlu0 %741, %v734
      %v743 = vpop.permute.xlu0 %742
      %vm744 = vcmp.ge.s32.totalorder %v731, %v737
      %vm745 = vcmp.ge.s32.totalorder %v731, %v740
      %vm746 = vcmp.ge.s32.totalorder %v731, %v743
      %v747 = vadd.s32 %v732, 24
      %v748 = vadd.s32 %v733, 24
      %v749 = vadd.s32 %v734, 24
      %750 = vset.pattern.permute.xlu0 3
      %751 = vperm.xlu0 %750, %v747
      %v752 = vpop.permute.xlu0 %751
      %753 = vset.pattern.permute.xlu0 3
      %754 = vperm.xlu0 %753, %v748
      %v755 = vpop.permute.xlu0 %754
      %756 = vset.pattern.permute.xlu0 3
      %757 = vperm.xlu0 %756, %v749
      %v758 = vpop.permute.xlu0 %757
      %vm759 = vcmp.lt.s32.totalorder %v731, %v752
      %vm760 = vcmp.lt.s32.totalorder %v731, %v755
      %vm761 = vcmp.lt.s32.totalorder %v731, %v758
      %vm762 = vmand %vm744, %vm759
      %vm763 = vmand %vm745, %vm760
      %vm764 = vmand %vm746, %vm761
      %v765 = vmul.f32 %v725, 1.442695
      %v766 = vpow.pop %v765
      %v767 = vmul.f32 %v727, 1.442695
      %v768 = vpow.pop %v767
      %v769 = vmul.f32 %v729, 1.442695
      %v770 = vpow.pop %v769
      %v771 = vsel %vm762, %v766, 0.0
      %v772 = vsel %vm763, %v768, 0.0
      %v773 = vsel %vm764, %v770, 0.0
      %v774 = vld [vmem:[%s380] sm:$0x1]
      %v775 = vld [vmem:[%s380 + $0x1] sm:$0x1]
      %v776 = vld [vmem:[%s380 + $0x2] sm:$0x1]
      %v778 = vlaneseq
      %v779 = vshrl.u32 %v778, 7
      %v780 = vsub.s32 0, %v779
      %v781 = vrot.slane %v774, %v780
      %v783 = vmul.f32 %v771, %v781
      %v784 = vmul.f32 %v772, %v781
      %v785 = vmul.f32 %v773, %v781
      %vm786 = vcmask 588800
      %v787 = vsel %vm786, %v783, 0.0
      %788 = vadd.xlane.f32.xlu0 %v787
      %v789 = vpop.xlane.xlu0 %788
      %v790 = vsel %vm786, %v784, 0.0
      %791 = vadd.xlane.f32.xlu0 %v790
      %v792 = vpop.xlane.xlu0 %791
      %v793 = vsel %vm786, %v785, 0.0
      %794 = vadd.xlane.f32.xlu0 %v793
      %v795 = vpop.xlane.xlu0 %794
      %v796 = vlog2.pop %v789
      %v797 = vmul.f32 %v796, 0.6931472
      %v798 = vlog2.pop %v792
      %v799 = vmul.f32 %v798, 0.6931472
      %v800 = vlog2.pop %v795
      %v801 = vmul.f32 %v800, 0.6931472
      %v802 = vadd.f32 %v797, 0.0
      %v803 = vadd.f32 %v799, 0.0
      %v804 = vadd.f32 %v801, 0.0
      %v806 = vlaneseq
      %v807 = vshrl.u32 %v806, 7
      %v808 = vsub.s32 0, %v807
      %v809 = vrot.slane %v775, %v808
      %v811 = vmul.f32 %v771, %v809
      %v812 = vmul.f32 %v772, %v809
      %v813 = vmul.f32 %v773, %v809
      %v814 = vsel %vm786, %v811, 0.0
      %815 = vadd.xlane.f32.xlu0 %v814
      %v816 = vpop.xlane.xlu0 %815
      %v817 = vsel %vm786, %v812, 0.0
      %818 = vadd.xlane.f32.xlu0 %v817
      %v819 = vpop.xlane.xlu0 %818
      %v820 = vsel %vm786, %v813, 0.0
      %821 = vadd.xlane.f32.xlu0 %v820
      %v822 = vpop.xlane.xlu0 %821
      %v823 = vlog2.pop %v816
      %v824 = vmul.f32 %v823, 0.6931472
      %v825 = vlog2.pop %v819
      %v826 = vmul.f32 %v825, 0.6931472
      %v827 = vlog2.pop %v822
      %v828 = vmul.f32 %v827, 0.6931472
      %v829 = vadd.f32 %v802, %v824
      %v830 = vadd.f32 %v803, %v826
      %v831 = vadd.f32 %v804, %v828
      %v833 = vlaneseq
      %v834 = vshrl.u32 %v833, 7
      %v835 = vsub.s32 0, %v834
      %v836 = vrot.slane %v776, %v835
      %v838 = vmul.f32 %v771, %v836
      %v839 = vmul.f32 %v772, %v836
      %v840 = vmul.f32 %v773, %v836
      %v841 = vsel %vm786, %v838, 0.0
      %842 = vadd.xlane.f32.xlu0 %v841
      %v843 = vpop.xlane.xlu0 %842
      %v844 = vsel %vm786, %v839, 0.0
      %845 = vadd.xlane.f32.xlu0 %v844
      %v846 = vpop.xlane.xlu0 %845
      %v847 = vsel %vm786, %v840, 0.0
      %848 = vadd.xlane.f32.xlu0 %v847
      %v849 = vpop.xlane.xlu0 %848
      %v850 = vlog2.pop %v843
      %v851 = vmul.f32 %v850, 0.6931472
      %v852 = vlog2.pop %v846
      %v853 = vmul.f32 %v852, 0.6931472
      %v854 = vlog2.pop %v849
      %v855 = vmul.f32 %v854, 0.6931472
      %v856 = vadd.f32 %v829, %v851
      %v857 = vadd.f32 %v830, %v853
      %v858 = vadd.f32 %v831, %v855
      %859 = vset.pattern.permute.xlu0 0
      %860 = vperm.xlu0 %859, %v732
      %v861 = vpop.permute.xlu0 %860
      %862 = vset.pattern.permute.xlu0 0
      %863 = vperm.xlu0 %862, %v733
      %v864 = vpop.permute.xlu0 %863
      %865 = vset.pattern.permute.xlu0 0
      %866 = vperm.xlu0 %865, %v734
      %v867 = vpop.permute.xlu0 %866
      %vm868 = vcmp.eq.s32.totalorder %v731, %v861
      %vm869 = vcmp.eq.s32.totalorder %v731, %v864
      %vm870 = vcmp.eq.s32.totalorder %v731, %v867
      %871 = vset.pattern.permute.xlu0 1
      %872 = vperm.xlu0 %871, %v732
      %v873 = vpop.permute.xlu0 %872
      %874 = vset.pattern.permute.xlu0 1
      %875 = vperm.xlu0 %874, %v733
      %v876 = vpop.permute.xlu0 %875
      %877 = vset.pattern.permute.xlu0 1
      %878 = vperm.xlu0 %877, %v734
      %v879 = vpop.permute.xlu0 %878
      %vm880 = vcmp.eq.s32.totalorder %v731, %v873
      %vm881 = vcmp.eq.s32.totalorder %v731, %v876
      %vm882 = vcmp.eq.s32.totalorder %v731, %v879
      %vm883 = vmor %vm868, %vm880
      %vm884 = vmor %vm869, %vm881
      %vm885 = vmor %vm870, %vm882
      %886 = vset.pattern.permute.xlu0 2
      %887 = vperm.xlu0 %886, %v732
      %v888 = vpop.permute.xlu0 %887
      %889 = vset.pattern.permute.xlu0 2
      %890 = vperm.xlu0 %889, %v733
      %v891 = vpop.permute.xlu0 %890
      %892 = vset.pattern.permute.xlu0 2
      %893 = vperm.xlu0 %892, %v734
      %v894 = vpop.permute.xlu0 %893
      %vm895 = vcmp.eq.s32.totalorder %v731, %v888
      %vm896 = vcmp.eq.s32.totalorder %v731, %v891
      %vm897 = vcmp.eq.s32.totalorder %v731, %v894
      %vm898 = vmor %vm883, %vm895
      %vm899 = vmor %vm884, %vm896
      %vm900 = vmor %vm885, %vm897
      %v901 = vsel %vm898, %v725, 0.0
      %v902 = vsel %vm899, %v727, 0.0
      %v903 = vsel %vm900, %v729, 0.0
      %v904 = vsel %vm786, %v901, 0.0
      %905 = vadd.xlane.f32.xlu0 %v904
      %v906 = vpop.xlane.xlu0 %905
      %v907 = vsel %vm786, %v902, 0.0
      %908 = vadd.xlane.f32.xlu0 %v907
      %v909 = vpop.xlane.xlu0 %908
      %v910 = vsel %vm786, %v903, 0.0
      %911 = vadd.xlane.f32.xlu0 %v910
      %v912 = vpop.xlane.xlu0 %911
      %v913 = vld [vmem:[%s390] sm:$0xff]
      %v914 = vld [vmem:[%s390 + $0x8] sm:$0xff]
      %v915 = vld [vmem:[%s390 + $0x10] sm:$0xff]
      %v916 = vsub.f32 %v856, %v906
      %v917 = vsub.f32 %v857, %v909
      %v918 = vsub.f32 %v858, %v912
      %v919 = vmul.f32 %v913, %v916
      %v920 = vmul.f32 %v914, %v917
      %v921 = vmul.f32 %v915, %v918
      %vm922 = vcmask 7168
      %v923 = vsel %vm922, %v919, 0.0
      %v924 = vsel %vm922, %v920, 0.0
      %v925 = vadd.f32 %v923, %v924
      %v926 = vsel %vm922, %v921, 0.0
      %v927 = vadd.f32 %v925, %v926
      %928 = vadd.xlane.f32.xlu0 %v927
      %v929 = vpop.xlane.xlu0 %928
      %v930 = vrot.slane %v929, 4
      %v931 = vadd.f32 %v929, %v930
      %v932 = vrot.slane %v931, 2
      %v933 = vadd.f32 %v931, %v932
      %v934 = vrot.slane %v933, 1
      %v935 = vadd.f32 %v933, %v934
      %s936 = vtos %v935
      %v937 = vstv %s936
      %938 = vst [vmem:[%s394] sm:$0xff] %v937
      %p939 = scmp.lt.s32.totalorder %s19, 1
      %s940 = scalar_select %p939, %s19, 1
      %s941 = smul.addr %s940, 8
      %s942 = scalar_lea.vmem %s8, %s941
      // Predicated region
      $region53: #{mtclf_forward.1} parent=51 // pred_check
        %p943 = pneg %p235
      $region54: #{mtclf_forward.1} parent=51 // pred_check_branch
        %945 = sbr.rel (%p943) target = $region56
      $region55: #{mtclf_forward.1} parent=51 // pred_region
        _
      $region56: #{mtclf_forward.1} parent=51 // pred_fallthru
        _
    $region52: #{mtclf_forward.1} parent=5 // pred_fallthru
      _
    %p946 = scmp.le.s32.totalorder 2, %s14
    // Predicated region
    $region57: #{mtclf_forward.1} parent=5 // pred_check
      %p947 = pneg %p946
    $region58: #{mtclf_forward.1} parent=5 // pred_check_branch
      %949 = sbr.rel (%p947) target = $region60
    $region59: #{mtclf_forward.1} parent=5 // pred_region
      %s950 = ssub.s32 %s14, 2
      // Predicated region
      $region61: #{mtclf_forward.1} parent=59 // pred_check
        %p951 = pneg %p241
      $region62: #{mtclf_forward.1} parent=59 // pred_check_branch
        %953 = sbr.rel (%p951) target = $region64
      $region63: #{mtclf_forward.1} parent=59 // pred_region
        %p954 = scmp.lt.s32.totalorder %s20, 1
        %s955 = scalar_select %p954, %s20, 1
        %s956 = smul.addr %s955, 8
        %s957 = scalar_lea.vmem %s8, %s956
      $region64: #{mtclf_forward.1} parent=59 // pred_fallthru
        _
    $region60: #{mtclf_forward.1} parent=5 // pred_fallthru
      _
  $region6: #{mtclf_forward.1} parent=0 // loop_footer
    %s18 = sadd.s32 1, %s14
  $region7: #{mtclf_forward.1} parent=0 // loop_footer_branch
    %13 = sbr.rel target = $region3
  $region8: #{mtclf_forward.1} parent=0 // loop_exit
    _

</llo_original>
